<compile_context>
chip_gen: v6e
topology: v6e:2x2x1
jax: 0.10.0
libtpu: 0.0.40
codegen_flags: <defaults>
</compile_context>

<pallas_src>
from typing import NamedTuple

import jax
import jax.numpy as jnp
from jax.experimental import pallas as pl
from jax.experimental.pallas import tpu as pltpu

LANE = 128


def _round_up(n, m):
    return ((n + m - 1) // m) * m


def _cdiv(a, b):
    return -(-a // b)


# ----------------------------------------------------------------------------- kernel
def _policy_fwd_kernel(x_ref, w1_ref, b1_ref, w2_ref, b2_ref, out_ref):
    x = x_ref[...]
    w1 = w1_ref[...]
    # Hidden layer: relu(x @ W1 + b1).  f32 accumulate, f32 bias/relu.
    h = jnp.dot(x, w1, preferred_element_type=jnp.float32) + b1_ref[...]
    h = jnp.maximum(h, 0.0)

    w2 = w2_ref[...]
    if w2.dtype != jnp.float32:
        # bf16 MXU path (weights were pre-cast in the wrapper); cast the
        # intermediate only — no DMA'd data is re-cast in-kernel.
        h = h.astype(w2.dtype)

    # Output layer: logits = h @ W2 + b2.  Padded logit columns carry a -1e30
    # f32 bias -> exp() underflows to exactly 0 there, softmax over real A only.
    logits = jnp.dot(h, w2, preferred_element_type=jnp.float32) + b2_ref[...]

    # Numerically stable softmax along the lane axis (exact normalization).
    m = jnp.max(logits, axis=-1, keepdims=True)
    e = jnp.exp(logits - m)
    denom = jnp.sum(e, axis=-1, keepdims=True)
    probs = e / denom

    # Only the real action columns are stored (out block last dim == A).
    a = out_ref.shape[-1]
    out_ref[...] = probs[:, :a].astype(out_ref.dtype)


# ----------------------------------------------------------------------------- params
class PolicyParams(NamedTuple):
    w1: jax.Array        # (S, L_pad)   matmul dtype (f32 or bf16)
    b1: jax.Array        # (1, L_pad)   f32
    w2: jax.Array        # (L_pad, A_pad) matmul dtype
    b2: jax.Array        # (1, A_pad)   f32, -1e30 in padded columns
    num_actions: int


def prepare_params(w1, b1, w2, b2, *, matmul_dtype=jnp.float32):
    """Pad hidden/action dims to 128 lanes ONCE (not per forward call)."""
    S, L = w1.shape
    A = w2.shape[1]
    L_pad = _round_up(max(L, 1), LANE)
    A_pad = _round_up(max(A, 1), LANE)

    w1p = jnp.zeros((S, L_pad), jnp.float32).at[:, :L].set(w1).astype(matmul_dtype)
    b1p = jnp.zeros((1, L_pad), jnp.float32).at[:, :L].set(jnp.reshape(b1, (1, L)))
    # Zero-padded hidden cols give relu(0+0)=0; zero-padded W2 rows contribute 0.
    w2p = jnp.zeros((L_pad, A_pad), jnp.float32).at[:L, :A].set(w2).astype(matmul_dtype)
    # Padded logit columns get a huge negative f32 bias -> exp() == 0 in softmax.
    b2p = jnp.full((1, A_pad), -1e30, jnp.float32).at[:, :A].set(jnp.reshape(b2, (1, A)))
    return PolicyParams(w1p, b1p, w2p, b2p, A)


# ----------------------------------------------------------------------------- wrapper
def policy_forward(x, params: PolicyParams, *, tile_b=1024):
    """softmax(relu(x @ W1 + b1) @ W2 + b2), softmax over the last axis.

    x : [B, S] float32.  Returns [B, A] float32 probabilities.
    """
    B, S = x.shape
    A = params.num_actions
    L_pad = params.w1.shape[1]
    A_pad = params.w2.shape[1]

    # ---- Batch tiling: tile_b multiple of 8, minimal B over-padding, and at
    # ---- least 2 grid steps for very large batches (v7x second TensorCore). ----
    B_pad8 = _round_up(max(B, 1), 8)
    tile_req = max(8, _round_up(min(tile_b, B_pad8), 8))
    num_tiles = _cdiv(B_pad8, tile_req)
    if num_tiles == 1 and B_pad8 >= 1024:
        num_tiles = 2
    tile = _round_up(_cdiv(B_pad8, num_tiles), 8)
    B_pad = num_tiles * tile

    xp = x.astype(params.w1.dtype)          # bf16 cast (if any) BEFORE the DMA
    if B_pad != B:
        xp = jnp.zeros((B_pad, S), xp.dtype).at[:B, :].set(xp)

    out_padded = pl.pallas_call(
        _policy_fwd_kernel,
        out_shape=jax.ShapeDtypeStruct((B_pad, A), jnp.float32),
        grid_spec=pltpu.PrefetchScalarGridSpec(
            num_scalar_prefetch=0,
            grid=(num_tiles,),
            in_specs=[
                pl.BlockSpec((tile, S), lambda i: (i, 0)),      # x: tiled over batch
                pl.BlockSpec((S, L_pad), lambda i: (0, 0)),     # weights: constant block,
                pl.BlockSpec((1, L_pad), lambda i: (0, 0)),     #   re-DMA elided across steps
                pl.BlockSpec((L_pad, A_pad), lambda i: (0, 0)),
                pl.BlockSpec((1, A_pad), lambda i: (0, 0)),
            ],
            # Output block last dim == full A -> legal BlockSpec, contiguous HBM
            # writeback of only the real action columns.
            out_specs=pl.BlockSpec((tile, A), lambda i: (i, 0)),
        ),
        compiler_params=pltpu.CompilerParams(
            # batch steps are independent -> shard across v7x's two TensorCores
            dimension_semantics=("parallel",),
        ),
    )(xp, params.w1, params.b1, params.w2, params.b2)

    return out_padded[:B, :]


# ----------------------------------------------------------------------------- reference
def init_params(key, S, L, A):
    """Deterministic init mimicking nn.Linear default: U(-1/sqrt(fan_in), ...)."""
    k1, k2, k3, k4 = jax.random.split(key, 4)
    bound1 = 1.0 / jnp.sqrt(S)
    bound2 = 1.0 / jnp.sqrt(L)
    # Stored already transposed relative to PyTorch's [out, in] convention.
    w1 = jax.random.uniform(k1, (S, L), jnp.float32, -bound1, bound1)
    b1 = jax.random.uniform(k2, (1, L), jnp.float32, -bound1, bound1)
    w2 = jax.random.uniform(k3, (L, A), jnp.float32, -bound2, bound2)
    b2 = jax.random.uniform(k4, (1, A), jnp.float32, -bound2, bound2)
    return w1, b1, w2, b2


def reference_forward(x, w1, b1, w2, b2):
    h = jnp.maximum(x @ w1 + b1, 0.0)
    logits = h @ w2 + b2
    return jax.nn.softmax(logits, axis=-1)


if __name__ == "__main__":
    # Small shapes consistent with the module: S=state dim, L=hidden, A=actions.
    B, S, L, A = 8, 16, 32, 4

    key = jax.random.PRNGKey(0)
    kx, kp = jax.random.split(key)
    x = jax.random.normal(kx, (B, S), jnp.float32)
    w1, b1, w2, b2 = init_params(kp, S, L, A)
    ref = reference_forward(x, w1, b1, w2, b2)

    # --- f32 matmul path (default). ---
    params = prepare_params(w1, b1, w2, b2)
    out = jax.block_until_ready(policy_forward(x, params))
    assert out.shape == (B, A)
    assert jnp.allclose(out, ref, atol=2e-3, rtol=2e-3), "f32 path mismatch vs reference"
    assert jnp.allclose(jnp.sum(out, axis=-1), 1.0, atol=1e-3), "rows must sum to 1"

    # --- multi-step batch grid (with batch padding) at a still-small size. ---
    B2 = 40
    x2 = jax.random.normal(jax.random.PRNGKey(1), (B2, S), jnp.float32)
    ref2 = reference_forward(x2, w1, b1, w2, b2)
    out2 = jax.block_until_ready(policy_forward(x2, params, tile_b=16))
    assert out2.shape == (B2, A)
    assert jnp.allclose(out2, ref2, atol=2e-3, rtol=2e-3), "gridded path mismatch"
    assert jnp.allclose(jnp.sum(out2, axis=-1), 1.0, atol=1e-3), "gridded rows must sum to 1"

    # --- bf16 matmul-input path (wrapper-side cast; v6e/v7x bandwidth opt). ---
    params_bf16 = prepare_params(w1, b1, w2, b2, matmul_dtype=jnp.bfloat16)
    out_bf16 = jax.block_until_ready(policy_forward(x, params_bf16))
    assert out_bf16.shape == (B, A)
    assert jnp.allclose(out_bf16, ref, atol=3e-2, rtol=3e-2), "bf16 path mismatch"

    print("KERNEL_OK")
</pallas_src>

<mosaic_0001>
module attributes {stable_mosaic.version = 11 : i64} {
  func.func @_policy_fwd_kernel(%arg0: i32, %arg1: memref<8x16xf32, #tpu.memory_space<vmem>>, %arg2: memref<16x128xf32, #tpu.memory_space<vmem>>, %arg3: memref<1x128xf32, #tpu.memory_space<vmem>>, %arg4: memref<128x128xf32, #tpu.memory_space<vmem>>, %arg5: memref<1x128xf32, #tpu.memory_space<vmem>>, %arg6: memref<8x4xf32, #tpu.memory_space<vmem>>) attributes {dimension_semantics = [#tpu.dimension_semantics<parallel>], iteration_bounds = array<i64: 1>, scalar_prefetch = 0 : i64, scratch_operands = 0 : i64, tpu.core_type = #tpu.core_type<tc>, window_params = [{transform_indices = @transform_0, window_bounds = array<i64: 8, 16>}, {pipeline_mode = #tpu.pipeline_mode<synchronous>, transform_indices = @transform_1, window_bounds = array<i64: 16, 128>}, {pipeline_mode = #tpu.pipeline_mode<synchronous>, transform_indices = @transform_2, window_bounds = array<i64: 1, 128>}, {pipeline_mode = #tpu.pipeline_mode<synchronous>, transform_indices = @transform_3, window_bounds = array<i64: 128, 128>}, {pipeline_mode = #tpu.pipeline_mode<synchronous>, transform_indices = @transform_4, window_bounds = array<i64: 1, 128>}, {transform_indices = @transform_5, window_bounds = array<i64: 8, 4>}]} {
    %c0 = arith.constant 0 : index
    %c0_0 = arith.constant 0 : index
    %0 = vector.load %arg1[%c0, %c0_0] : memref<8x16xf32, #tpu.memory_space<vmem>>, vector<8x16xf32>
    %c0_1 = arith.constant 0 : index
    %c0_2 = arith.constant 0 : index
    %1 = vector.load %arg2[%c0_1, %c0_2] : memref<16x128xf32, #tpu.memory_space<vmem>>, vector<16x128xf32>
    %cst = arith.constant dense<0.000000e+00> : vector<8x128xf32>
    %2 = tpu.matmul %0, %1, %cst {dimension_numbers = #tpu.dot_dimension_numbers<[1], [0], [0], [1], [0, 0, 1, 1], [], []>} : vector<8x16xf32>, vector<16x128xf32>, vector<8x128xf32> -> vector<8x128xf32>
    %c0_3 = arith.constant 0 : index
    %c0_4 = arith.constant 0 : index
    %3 = vector.load %arg3[%c0_3, %c0_4] : memref<1x128xf32, #tpu.memory_space<vmem>>, vector<1x128xf32>
    %4 = vector.broadcast %3 : vector<1x128xf32> to vector<8x128xf32>
    %5 = arith.addf %2, %4 : vector<8x128xf32>
    %cst_5 = arith.constant 0.000000e+00 : f32
    %6 = vector.broadcast %cst_5 : f32 to vector<8x128xf32>
    %7 = arith.maximumf %5, %6 : vector<8x128xf32>
    %c0_6 = arith.constant 0 : index
    %c0_7 = arith.constant 0 : index
    %8 = vector.load %arg4[%c0_6, %c0_7] : memref<128x128xf32, #tpu.memory_space<vmem>>, vector<128x128xf32>
    %cst_8 = arith.constant dense<0.000000e+00> : vector<8x128xf32>
    %9 = tpu.matmul %7, %8, %cst_8 {dimension_numbers = #tpu.dot_dimension_numbers<[1], [0], [0], [1], [0, 0, 1, 1], [], []>} : vector<8x128xf32>, vector<128x128xf32>, vector<8x128xf32> -> vector<8x128xf32>
    %c0_9 = arith.constant 0 : index
    %c0_10 = arith.constant 0 : index
    %10 = vector.load %arg5[%c0_9, %c0_10] : memref<1x128xf32, #tpu.memory_space<vmem>>, vector<1x128xf32>
    %11 = vector.broadcast %10 : vector<1x128xf32> to vector<8x128xf32>
    %12 = arith.addf %9, %11 : vector<8x128xf32>
    %cst_11 = arith.constant dense<0xFF800000> : vector<8xf32>
    %13 = vector.multi_reduction <maximumf>, %12, %cst_11 [1] : vector<8x128xf32> to vector<8xf32>
    %14 = vector.shape_cast %13 : vector<8xf32> to vector<8x1xf32>
    %15 = vector.broadcast %14 : vector<8x1xf32> to vector<8x128xf32>
    %16 = arith.subf %12, %15 : vector<8x128xf32>
    %17 = math.exp %16 : vector<8x128xf32>
    %cst_12 = arith.constant dense<0.000000e+00> : vector<8xf32>
    %18 = vector.multi_reduction <add>, %17, %cst_12 [1] : vector<8x128xf32> to vector<8xf32>
    %19 = vector.shape_cast %18 : vector<8xf32> to vector<8x1xf32>
    %20 = vector.broadcast %19 : vector<8x1xf32> to vector<8x128xf32>
    %21 = arith.divf %17, %20 : vector<8x128xf32>
    %22 = vector.extract_strided_slice %21 {offsets = [0, 0], sizes = [8, 4], strides = [1, 1]} : vector<8x128xf32> to vector<8x4xf32>
    %c0_13 = arith.constant 0 : index
    %c0_14 = arith.constant 0 : index
    %23 = vector.load %arg6[%c0_13, %c0_14] : memref<8x4xf32, #tpu.memory_space<vmem>>, vector<8x4xf32>
    tpu.vector_store %arg6[%c0_13, %c0_14], %22 {strides = array<i32>} : memref<8x4xf32, #tpu.memory_space<vmem>>, vector<8x4xf32>,
    return
  }
  func.func @transform_0(%arg0: i32) -> (i32, i32) {
    %c0_i32 = arith.constant 0 : i32
    %c0_i32_0 = arith.constant 0 : i32
    return %arg0, %c0_i32 : i32, i32
  }
  func.func @transform_1(%arg0: i32) -> (i32, i32) {
    %c0_i32 = arith.constant 0 : i32
    %c0_i32_0 = arith.constant 0 : i32
    %c0_i32_1 = arith.constant 0 : i32
    return %c0_i32, %c0_i32_0 : i32, i32
  }
  func.func @transform_2(%arg0: i32) -> (i32, i32) {
    %c0_i32 = arith.constant 0 : i32
    %c0_i32_0 = arith.constant 0 : i32
    %c0_i32_1 = arith.constant 0 : i32
    return %c0_i32, %c0_i32_0 : i32, i32
  }
  func.func @transform_3(%arg0: i32) -> (i32, i32) {
    %c0_i32 = arith.constant 0 : i32
    %c0_i32_0 = arith.constant 0 : i32
    %c0_i32_1 = arith.constant 0 : i32
    return %c0_i32, %c0_i32_0 : i32, i32
  }
  func.func @transform_4(%arg0: i32) -> (i32, i32) {
    %c0_i32 = arith.constant 0 : i32
    %c0_i32_0 = arith.constant 0 : i32
    %c0_i32_1 = arith.constant 0 : i32
    return %c0_i32, %c0_i32_0 : i32, i32
  }
  func.func @transform_5(%arg0: i32) -> (i32, i32) {
    %c0_i32 = arith.constant 0 : i32
    %c0_i32_0 = arith.constant 0 : i32
    return %arg0, %c0_i32 : i32, i32
  }
}

</mosaic_0001>

<llo_original>
// kernel: tpu_custom_call.1
$region0: #{tpu_custom_call.1}
  #allocation0 [shape = 'u32[]', space=smem, size = 0x4, offset = 0x4, fixed_abs, tag = 'smem constant byte address 0x4 - core index']
  #allocation1 [shape = 'u32[144,128]{1,0:T(1,128)}', space=vmem, size = 0x12000, scoped, tag = 'internal scratch']
  %s0 = inlined_call_operand.hbm [shape: f32[8,16], index: 0, kind: input, shape index: {}]
  %s1 = inlined_call_operand.hbm [shape: f32[16,128], index: 1, kind: input, shape index: {}]
  %s2 = inlined_call_operand.vmem [shape: f32[1,128], index: 2, kind: input, shape index: {}]
  %s3 = inlined_call_operand.hbm [shape: f32[128,128], index: 3, kind: input, shape index: {}]
  %s4 = inlined_call_operand.vmem [shape: f32[1,128], index: 4, kind: input, shape index: {}]
  %s5 = inlined_call_operand.vmem [shape: f32[8,4], index: 5, kind: output, shape index: {}]
  %s6 = sld [smem:[#allocation0]]
  $region42: #{tpu_custom_call.1} parent=0
    _
  %s8 = ssub.s32 1, %s6
  %s9 = scalar_select 0, %s8, %s6
  $region1: #{tpu_custom_call.1} parent=0
    #allocation2 [shape = 'u8[4096]{0}', space=vmem, size = 0x1000, scoped, tag = 'input window, operand 0, single buffered']
    #allocation3 [shape = 's32[1]{0}', space=sflag, size = 0x4, scoped, tag = 'scoped memory for tpu_custom_call.1']
    #allocation4 [shape = 'u8[8192]{0}', space=vmem, size = 0x2000, scoped, tag = 'input window, operand 1, single buffered']
    #allocation5 [shape = 's32[1]{0}', space=sflag, size = 0x4, scoped, tag = 'scoped memory for tpu_custom_call.1']
    #allocation6 [shape = 'u8[65536]{0}', space=vmem, size = 0x10000, scoped, tag = 'input window, operand 3, single buffered']
    %10 = vsyncpa [#allocation3], 0
    %11 = vsyncpa [#allocation5], 0
    // Predicated region
    $region2: #{tpu_custom_call.1} parent=1 // pred_check
      _
    $region3: #{tpu_custom_call.1} parent=1 // pred_check_branch
      %13 = sbr.rel (0) target = $region5
    $region4: #{tpu_custom_call.1} parent=1 // pred_region
      %s15 = ssub.s32 128, 128
      %16 = vsyncadd [#allocation3], %s15
      %s18 = sshll.u32 [#allocation2], 4
      %s19 = int_to_ptr.vmem [resolvable:$true] %s18
      %21 = dma.hbm_to_vmem [thread:$0]  %s0, 128, %s19, [#allocation3]
    $region5: #{tpu_custom_call.1} parent=1 // pred_fallthru
      _
    // Predicated region
    $region6: #{tpu_custom_call.1} parent=1 // pred_check
      _
    $region7: #{tpu_custom_call.1} parent=1 // pred_check_branch
      %23 = sbr.rel (0) target = $region9
    $region8: #{tpu_custom_call.1} parent=1 // pred_region
      %s25 = ssub.s32 256, 256
      %26 = vsyncadd [#allocation5], %s25
      %s27 = sshll.u32 [#allocation4], 4
      %s28 = int_to_ptr.vmem [resolvable:$true] %s27
      %33 = dma.hbm_to_vmem [thread:$0]  %s1, 256, %s28, [#allocation5], 128, 128, 8
    $region9: #{tpu_custom_call.1} parent=1 // pred_fallthru
      _
    // Predicated region
    $region10: #{tpu_custom_call.1} parent=1 // pred_check
      _
    $region11: #{tpu_custom_call.1} parent=1 // pred_check_branch
      %35 = sbr.rel (0) target = $region13
    $region12: #{tpu_custom_call.1} parent=1 // pred_region
      _
    $region13: #{tpu_custom_call.1} parent=1 // pred_fallthru
      _
    // Predicated region
    $region14: #{tpu_custom_call.1} parent=1 // pred_check
      _
    $region15: #{tpu_custom_call.1} parent=1 // pred_check_branch
      %37 = sbr.rel (0) target = $region17
    $region16: #{tpu_custom_call.1} parent=1 // pred_region
      %s39 = ssub.s32 2048, 2048
      %40 = vsyncadd [#allocation5], %s39
      %s41 = sshll.u32 [#allocation6], 4
      %s42 = int_to_ptr.vmem [resolvable:$true] %s41
      %47 = dma.hbm_to_vmem [thread:$0]  %s3, 2048, %s42, [#allocation5], 128, 128, 8
    $region17: #{tpu_custom_call.1} parent=1 // pred_fallthru
      _
    // Predicated region
    $region18: #{tpu_custom_call.1} parent=1 // pred_check
      _
    $region19: #{tpu_custom_call.1} parent=1 // pred_check_branch
      %49 = sbr.rel (0) target = $region21
    $region20: #{tpu_custom_call.1} parent=1 // pred_region
      _
    $region21: #{tpu_custom_call.1} parent=1 // pred_fallthru
      _
    // Predicated region
    $region22: #{tpu_custom_call.1} parent=1 // pred_check
      _
    $region23: #{tpu_custom_call.1} parent=1 // pred_check_branch
      %51 = sbr.rel (0) target = $region25
    $region24: #{tpu_custom_call.1} parent=1 // pred_region
      %52 = dma.done [#allocation3], 128
    $region25: #{tpu_custom_call.1} parent=1 // pred_fallthru
      _
    // Predicated region
    $region26: #{tpu_custom_call.1} parent=1 // pred_check
      _
    $region27: #{tpu_custom_call.1} parent=1 // pred_check_branch
      %54 = sbr.rel (0) target = $region29
    $region28: #{tpu_custom_call.1} parent=1 // pred_region
      %55 = dma.done [#allocation5], 256
    $region29: #{tpu_custom_call.1} parent=1 // pred_fallthru
      _
    // Predicated region
    $region30: #{tpu_custom_call.1} parent=1 // pred_check
      _
    $region31: #{tpu_custom_call.1} parent=1 // pred_check_branch
      %57 = sbr.rel (0) target = $region33
    $region32: #{tpu_custom_call.1} parent=1 // pred_region
      %58 = dma.done [#allocation5], 2048
    $region33: #{tpu_custom_call.1} parent=1 // pred_fallthru
      _
    %v59 = vld [vmem:[#allocation2] sm:$0xff]
    %v60 = vld [vmem:[#allocation4] sm:$0xff]
    %v61 = vld [vmem:[#allocation4 + $0x8] sm:$0xff]
    %v62 = vld [vmem:[%s2] sm:$0x1]
    %v64 = vlaneseq
    %v65 = vshrl.u32 %v64, 7
    %v66 = vsub.s32 0, %v65
    %v67 = vrot.slane %v62, %v66
    %vm69 = vcmask 130048
    %v71 = vsel %vm69, %v59, 0
    %73 = vmatprep.subr.mxu0 0.0
    %74 = vmatpush1.msra.mxu0 0.0
    %75 = vmatprep.subr.mxu0 0.0
    %76 = vmatpush1.msra.mxu0 0.0
    %77 = vmatprep.subr.mxu0 0.0
    %78 = vmatpush1.msra.mxu0 0.0
    %79 = vmatprep.subr.mxu0 0.0
    %80 = vmatpush1.msra.mxu0 0.0
    %81 = vmatprep.subr.mxu0 0.0
    %82 = vmatpush1.msra.mxu0 0.0
    %83 = vmatprep.subr.mxu0 0.0
    %84 = vmatpush1.msra.mxu0 0.0
    %85 = vmatprep.subr.mxu0 0.0
    %86 = vmatpush1.msra.mxu0 0.0
    %87 = vmatprep.subr.mxu0 0.0
    %88 = vmatpush1.msra.mxu0 0.0
    %89 = vmatprep.subr.mxu0 0.0
    %90 = vmatpush1.msra.mxu0 0.0
    %91 = vmatprep.subr.mxu0 0.0
    %92 = vmatpush1.msra.mxu0 0.0
    %93 = vmatprep.subr.mxu0 0.0
    %94 = vmatpush1.msra.mxu0 0.0
    %95 = vmatprep.subr.mxu0 0.0
    %96 = vmatpush1.msra.mxu0 0.0
    %97 = vmatprep.subr.mxu0 0.0
    %98 = vmatpush1.msra.mxu0 0.0
    %99 = vmatprep.subr.mxu0 0.0
    %100 = vmatpush1.msra.mxu0 0.0
    %101 = vmatprep.subr.mxu0 0.0
    %102 = vmatpush1.msra.mxu0 %v61
    %103 = vmatprep.subr.mxu0 0.0
    %104 = vmatpush1.msra.mxu0 %v60
    %105 = vmatprep.subr.mxu0 0.0
    %106 = vmatpush2.msra.mxu0 0.0
    %107 = vmatprep.subr.mxu0 0.0
    %108 = vmatpush2.msra.mxu0 0.0
    %109 = vmatprep.subr.mxu0 0.0
    %110 = vmatpush2.msra.mxu0 0.0
    %111 = vmatprep.subr.mxu0 0.0
    %112 = vmatpush2.msra.mxu0 0.0
    %113 = vmatprep.subr.mxu0 0.0
    %114 = vmatpush2.msra.mxu0 0.0
    %115 = vmatprep.subr.mxu0 0.0
    %116 = vmatpush2.msra.mxu0 0.0
    %117 = vmatprep.subr.mxu0 0.0
    %118 = vmatpush2.msra.mxu0 0.0
    %119 = vmatprep.subr.mxu0 0.0
    %120 = vmatpush2.msra.mxu0 0.0
    %121 = vmatprep.subr.mxu0 0.0
    %122 = vmatpush2.msra.mxu0 0.0
    %123 = vmatprep.subr.mxu0 0.0
    %124 = vmatpush2.msra.mxu0 0.0
    %125 = vmatprep.subr.mxu0 0.0
    %126 = vmatpush2.msra.mxu0 0.0
    %127 = vmatprep.subr.mxu0 0.0
    %128 = vmatpush2.msra.mxu0 0.0
    %129 = vmatprep.subr.mxu0 0.0
    %130 = vmatpush2.msra.mxu0 0.0
    %131 = vmatprep.subr.mxu0 0.0
    %132 = vmatpush2.msra.mxu0 0.0
    %133 = vmatprep.subr.mxu0 0.0
    %134 = vmatpush2.msra.mxu0 0.0
    %135 = vmatprep.subr.mxu0 0.0
    %136 = vmatpush2.msra.mxu0 0.0
    %137 = vmatprep.mubr.f32.mxu0 0.0
    %138 = vmatmul.mubr.f32.gmra.mxu0 %v71
    %v139 = vpop.f32.mrf.mxu0
    %v140 = vadd.f32 %v67, %v139
    %v141 = vpop.f32.mrf.mxu0
    %142 = vdwg.mxu0
    %v143 = vmax.f32 %v140, 0.0
    %v144 = vld [vmem:[#allocation6] sm:$0xff]
    %v145 = vld [vmem:[#allocation6 + $0x8] sm:$0xff]
    %v146 = vld [vmem:[#allocation6 + $0x10] sm:$0xff]
    %v147 = vld [vmem:[#allocation6 + $0x18] sm:$0xff]
    %v148 = vld [vmem:[#allocation6 + $0x20] sm:$0xff]
    %v149 = vld [vmem:[#allocation6 + $0x28] sm:$0xff]
    %v150 = vld [vmem:[#allocation6 + $0x30] sm:$0xff]
    %v151 = vld [vmem:[#allocation6 + $0x38] sm:$0xff]
    %v152 = vld [vmem:[#allocation6 + $0x40] sm:$0xff]
    %v153 = vld [vmem:[#allocation6 + $0x48] sm:$0xff]
    %v154 = vld [vmem:[#allocation6 + $0x50] sm:$0xff]
    %v155 = vld [vmem:[#allocation6 + $0x58] sm:$0xff]
    %v156 = vld [vmem:[#allocation6 + $0x60] sm:$0xff]
    %v157 = vld [vmem:[#allocation6 + $0x68] sm:$0xff]
    %v158 = vld [vmem:[#allocation6 + $0x70] sm:$0xff]
    %v159 = vld [vmem:[#allocation6 + $0x78] sm:$0xff]
    %v160 = vld [vmem:[%s4] sm:$0x1]
    %v162 = vlaneseq
    %v163 = vshrl.u32 %v162, 7
    %v164 = vsub.s32 0, %v163
    %v165 = vrot.slane %v160, %v164
    %167 = vmatprep.subr.mxu0 0.0
    %168 = vmatpush1.msra.mxu0 %v159
    %169 = vmatprep.subr.mxu0 0.0
    %170 = vmatpush1.msra.mxu0 %v158
    %171 = vmatprep.subr.mxu0 0.0
    %172 = vmatpush1.msra.mxu0 %v157
    %173 = vmatprep.subr.mxu0 0.0
    %174 = vmatpush1.msra.mxu0 %v156
    %175 = vmatprep.subr.mxu0 0.0
    %176 = vmatpush1.msra.mxu0 %v155
    %177 = vmatprep.subr.mxu0 0.0
    %178 = vmatpush1.msra.mxu0 %v154
    %179 = vmatprep.subr.mxu0 0.0
    %180 = vmatpush1.msra.mxu0 %v153
    %181 = vmatprep.subr.mxu0 0.0
    %182 = vmatpush1.msra.mxu0 %v152
    %183 = vmatprep.subr.mxu0 0.0
    %184 = vmatpush1.msra.mxu0 %v151
    %185 = vmatprep.subr.mxu0 0.0
    %186 = vmatpush1.msra.mxu0 %v150
    %187 = vmatprep.subr.mxu0 0.0
    %188 = vmatpush1.msra.mxu0 %v149
    %189 = vmatprep.subr.mxu0 0.0
    %190 = vmatpush1.msra.mxu0 %v148
    %191 = vmatprep.subr.mxu0 0.0
    %192 = vmatpush1.msra.mxu0 %v147
    %193 = vmatprep.subr.mxu0 0.0
    %194 = vmatpush1.msra.mxu0 %v146
    %195 = vmatprep.subr.mxu0 0.0
    %196 = vmatpush1.msra.mxu0 %v145
    %197 = vmatprep.subr.mxu0 0.0
    %198 = vmatpush1.msra.mxu0 %v144
    %199 = vmatprep.subr.mxu0 0.0
    %200 = vmatpush2.msra.mxu0 0.0
    %201 = vmatprep.subr.mxu0 0.0
    %202 = vmatpush2.msra.mxu0 0.0
    %203 = vmatprep.subr.mxu0 0.0
    %204 = vmatpush2.msra.mxu0 0.0
    %205 = vmatprep.subr.mxu0 0.0
    %206 = vmatpush2.msra.mxu0 0.0
    %207 = vmatprep.subr.mxu0 0.0
    %208 = vmatpush2.msra.mxu0 0.0
    %209 = vmatprep.subr.mxu0 0.0
    %210 = vmatpush2.msra.mxu0 0.0
    %211 = vmatprep.subr.mxu0 0.0
    %212 = vmatpush2.msra.mxu0 0.0
    %213 = vmatprep.subr.mxu0 0.0
    %214 = vmatpush2.msra.mxu0 0.0
    %215 = vmatprep.subr.mxu0 0.0
    %216 = vmatpush2.msra.mxu0 0.0
    %217 = vmatprep.subr.mxu0 0.0
    %218 = vmatpush2.msra.mxu0 0.0
    %219 = vmatprep.subr.mxu0 0.0
    %220 = vmatpush2.msra.mxu0 0.0
    %221 = vmatprep.subr.mxu0 0.0
    %222 = vmatpush2.msra.mxu0 0.0
    %223 = vmatprep.subr.mxu0 0.0
    %224 = vmatpush2.msra.mxu0 0.0
    %225 = vmatprep.subr.mxu0 0.0
    %226 = vmatpush2.msra.mxu0 0.0
    %227 = vmatprep.subr.mxu0 0.0
    %228 = vmatpush2.msra.mxu0 0.0
    %229 = vmatprep.subr.mxu0 0.0
    %230 = vmatpush2.msra.mxu0 0.0
    %231 = vmatprep.mubr.f32.mxu0 0.0
    %232 = vmatmul.mubr.f32.gmra.mxu0 %v143
    %v233 = vpop.f32.mrf.mxu0
    %v234 = vadd.f32 %v165, %v233
    %v235 = vpop.f32.mrf.mxu0
    %236 = vdwg.mxu0
    %237 = vmax.xlane.f32.xlu0 %v234
    %v238 = vpop.xlane.xlu0 %237
    %v239 = vsub.f32 %v234, %v238
    %v240 = vmul.f32 %v239, 1.442695
    %v241 = vpow.pop %v240
    %242 = vadd.xlane.f32.xlu0 %v241
    %v243 = vpop.xlane.xlu0 %242
    %v244 = vrcp.pop %v243
    %v245 = vmul.f32 %v241, %v244
    %vm246 = vcmask 31744
    %247 = vst.msk [vmem:[%s5] sm:$0xff] %vm246, %v245
    // Predicated region
    $region34: #{tpu_custom_call.1} parent=1 // pred_check
      _
    $region35: #{tpu_custom_call.1} parent=1 // pred_check_branch
      %249 = sbr.rel (0) target = $region37
    $region36: #{tpu_custom_call.1} parent=1 // pred_region
      _
    $region37: #{tpu_custom_call.1} parent=1 // pred_fallthru
      _
    // Predicated region
    $region38: #{tpu_custom_call.1} parent=1 // pred_check
      _
    $region39: #{tpu_custom_call.1} parent=1 // pred_check_branch
      %251 = sbr.rel (0) target = $region41
    $region40: #{tpu_custom_call.1} parent=1 // pred_region
      _
    $region41: #{tpu_custom_call.1} parent=1 // pred_fallthru
      _
    %252 = vsyncpa [#allocation3], 1
    %253 = vsyncpa [#allocation5], 1

</llo_original>
